<compile_context>
chip_gen: v7x
topology: tpu7x:2x2x1
jax: 0.10.0
libtpu: 0.0.40
codegen_flags: <defaults>
</compile_context>

<pallas_src>
import functools
import math

import jax
import jax.numpy as jnp
from jax.experimental import pallas as pl
from jax.experimental.pallas import tpu as pltpu


def _vmem_limit_bytes():
    """Generation-aware scoped-VMEM budget (~75% of physical, capped at 100 MiB)."""
    cap = 64 * 1024 * 1024
    try:
        info = pltpu.get_tpu_info()
        cap = int(getattr(info, "vmem_capacity_bytes", cap))
    except Exception:
        pass
    return min(int(cap * 3 // 4), 100 * 1024 * 1024)


_VMEM_LIMIT = _vmem_limit_bytes()


def _tile(dim, target, align):
    """Largest divisor of `dim` that is <= target and a multiple of `align`.

    Falls back to the full dim (always a legal block shape) when no aligned
    divisor exists or when dim <= target.  Guarantees (8, 128)-aligned blocks.
    """
    if dim <= target:
        return dim
    t = (target // align) * align
    while t >= align:
        if dim % t == 0:
            return t
        t -= align
    return dim


# ----------------------------- Pallas kernels -----------------------------

def _linear_kernel(x_ref, w_ref, b_ref, o_ref, acc_ref, *, act):
    @pl.when(pl.program_id(2) == 0)
    def _():
        acc_ref[...] = jnp.zeros_like(acc_ref)

    # x and w both arrive in bf16; accumulate in f32 on the MXU.
    acc_ref[...] += jnp.dot(x_ref[...], w_ref[...],
                            preferred_element_type=jnp.float32)

    @pl.when(pl.program_id(2) == pl.num_programs(2) - 1)
    def _():
        y = acc_ref[...] + b_ref[...]
        if act == "gelu":
            # TODO(synk): HF BERT uses exact erf-GELU; tanh-approx used for Mosaic lowering safety.
            y = jax.nn.gelu(y, approximate=True)
        elif act == "tanh":
            y = jnp.tanh(y)
        o_ref[...] = y.astype(o_ref.dtype)


def linear(x, w, b, act="none", *, out_dtype=jnp.bfloat16, tm=512, tn=512, tk=512):
    """o = act(x @ w + b); x:(M,K) bf16, w:(K,N) bf16, b:(N,) f32. Tiled + pipelined."""
    M, K = x.shape
    N = w.shape[1]
    tm = _tile(M, tm, 8)
    tn = _tile(N, tn, 128)
    tk = _tile(K, tk, 128)
    return pl.pallas_call(
        functools.partial(_linear_kernel, act=act),
        out_shape=jax.ShapeDtypeStruct((M, N), out_dtype),
        grid=(M // tm, N // tn, K // tk),
        in_specs=[
            pl.BlockSpec((tm, tk), lambda i, j, k: (i, k)),
            pl.BlockSpec((tk, tn), lambda i, j, k: (k, j)),
            pl.BlockSpec((1, tn), lambda i, j, k: (0, j)),
        ],
        out_specs=pl.BlockSpec((tm, tn), lambda i, j, k: (i, j)),
        scratch_shapes=[pltpu.VMEM((tm, tn), jnp.float32)],
        compiler_params=pltpu.CompilerParams(
            dimension_semantics=("parallel", "parallel", "arbitrary"),
            vmem_limit_bytes=_VMEM_LIMIT),
    )(x.astype(jnp.bfloat16), w, b.reshape(1, N))


def _linear_res_ln_kernel(x_ref, w_ref, b_ref, r_ref, g_ref, be_ref, o_ref, acc_ref, *, eps):
    @pl.when(pl.program_id(1) == 0)
    def _():
        acc_ref[...] = jnp.zeros_like(acc_ref)

    acc_ref[...] += jnp.dot(x_ref[...], w_ref[...],
                            preferred_element_type=jnp.float32)

    @pl.when(pl.program_id(1) == pl.num_programs(1) - 1)
    def _():
        h = acc_ref[...] + b_ref[...] + r_ref[...].astype(jnp.float32)
        mu = jnp.mean(h, axis=-1, keepdims=True)
        var = jnp.mean(jnp.square(h - mu), axis=-1, keepdims=True)
        o_ref[...] = ((h - mu) * jax.lax.rsqrt(var + eps) * g_ref[...] + be_ref[...]
                      ).astype(o_ref.dtype)


def linear_residual_layernorm(x, w, b, residual, gamma, beta, *, eps=1e-12, tm=512, tk=512):
    """LayerNorm(residual + x @ w + b) with add + LN fused into the matmul epilogue.

    Output width (= hidden size) is kept un-tiled so the LN epilogue sees full rows.
    """
    M, K = x.shape
    N = w.shape[1]
    tm = _tile(M, tm, 8)
    tk = _tile(K, tk, 128)
    return pl.pallas_call(
        functools.partial(_linear_res_ln_kernel, eps=eps),
        out_shape=jax.ShapeDtypeStruct((M, N), jnp.bfloat16),
        grid=(M // tm, K // tk),
        in_specs=[
            pl.BlockSpec((tm, tk), lambda i, k: (i, k)),
            pl.BlockSpec((tk, N), lambda i, k: (k, 0)),
            pl.BlockSpec((1, N), lambda i, k: (0, 0)),
            pl.BlockSpec((tm, N), lambda i, k: (i, 0)),
            pl.BlockSpec((1, N), lambda i, k: (0, 0)),
            pl.BlockSpec((1, N), lambda i, k: (0, 0)),
        ],
        out_specs=pl.BlockSpec((tm, N), lambda i, k: (i, 0)),
        scratch_shapes=[pltpu.VMEM((tm, N), jnp.float32)],
        compiler_params=pltpu.CompilerParams(
            dimension_semantics=("parallel", "arbitrary"),
            vmem_limit_bytes=_VMEM_LIMIT),
    )(x.astype(jnp.bfloat16), w, b.reshape(1, N),
      residual.astype(jnp.bfloat16), gamma.reshape(1, N), beta.reshape(1, N))


def _ln_kernel(x_ref, g_ref, b_ref, o_ref, *, eps):
    h = x_ref[...].astype(jnp.float32)
    mu = jnp.mean(h, axis=-1, keepdims=True)
    var = jnp.mean(jnp.square(h - mu), axis=-1, keepdims=True)
    o_ref[...] = ((h - mu) * jax.lax.rsqrt(var + eps) * g_ref[...] + b_ref[...]
                  ).astype(o_ref.dtype)


def layernorm(x, gamma, beta, *, eps=1e-12, tm=512):
    """Row-tiled LayerNorm over the last dim (BERT eps=1e-12); bf16 output."""
    M, H = x.shape
    tm = _tile(M, tm, 8)
    return pl.pallas_call(
        functools.partial(_ln_kernel, eps=eps),
        out_shape=jax.ShapeDtypeStruct((M, H), jnp.bfloat16),
        grid=(M // tm,),
        in_specs=[
            pl.BlockSpec((tm, H), lambda i: (i, 0)),
            pl.BlockSpec((1, H), lambda i: (0, 0)),
            pl.BlockSpec((1, H), lambda i: (0, 0)),
        ],
        out_specs=pl.BlockSpec((tm, H), lambda i: (i, 0)),
        compiler_params=pltpu.CompilerParams(
            dimension_semantics=("parallel",),
            vmem_limit_bytes=_VMEM_LIMIT),
    )(x, gamma.reshape(1, H), beta.reshape(1, H))


def _attn_kernel(qkv_ref, m_ref, o_ref, *, num_heads, head_dim, hidden):
    """Per-batch multi-head attention over the fused (1, S, 3H) QKV block.

    The 1/sqrt(head_dim) scale is already folded into the Q projection weights.
    Heads are unrolled statically: all per-head slices stay in VMEM (no HBM
    transposes / slices), and the output is one lane-dense (1, S, H) store.
    """
    S = qkv_ref.shape[1]
    m = m_ref[0].astype(jnp.float32)                       # (1, S) additive mask
    ctx_heads = []
    for h in range(num_heads):
        qo = h * head_dim
        q = qkv_ref[0, :, qo:qo + head_dim]                                    # (S, hd) bf16
        k = qkv_ref[0, :, hidden + qo:hidden + qo + head_dim]                  # (S, hd) bf16
        v = qkv_ref[0, :, 2 * hidden + qo:2 * hidden + qo + head_dim]          # (S, hd) bf16
        # q @ k^T contracting last dims -> no explicit transpose on the XLU.
        s = jax.lax.dot_general(q, k, (((1,), (1,)), ((), ())),
                                preferred_element_type=jnp.float32)            # (S, S)
        s = s + m
        s = s - jnp.max(s, axis=-1, keepdims=True)
        p = jnp.exp(s)
        p = p * pl.reciprocal(jnp.sum(p, axis=-1, keepdims=True), approx=True)
        ctx_heads.append(jnp.dot(p.astype(jnp.bfloat16), v,
                                 preferred_element_type=jnp.float32))          # (S, hd)
    ctx = jnp.concatenate(ctx_heads, axis=-1)                                  # (S, H)
    o_ref[...] = ctx.reshape(1, S, hidden).astype(o_ref.dtype)


def multihead_attention(qkv, mask_add, *, num_heads):
    """qkv: (B, S, 3H) bf16 fused slab; mask_add: (B, 1, S) additive mask."""
    B, S, H3 = qkv.shape
    H = H3 // 3
    hd = H // num_heads
    return pl.pallas_call(
        functools.partial(_attn_kernel, num_heads=num_heads, head_dim=hd, hidden=H),
        out_shape=jax.ShapeDtypeStruct((B, S, H), jnp.bfloat16),
        grid=(B,),
        in_specs=[
            pl.BlockSpec((1, S, H3), lambda b: (b, 0, 0)),
            pl.BlockSpec((1, 1, S), lambda b: (b, 0, 0)),
        ],
        out_specs=pl.BlockSpec((1, S, H), lambda b: (b, 0, 0)),
        compiler_params=pltpu.CompilerParams(
            dimension_semantics=("parallel",),
            vmem_limit_bytes=_VMEM_LIMIT),
    )(qkv, mask_add)


def _ce_kernel(logits_ref, onehot_ref, loss_ref):
    z = logits_ref[...].astype(jnp.float32)
    z = z - jnp.max(z, axis=-1, keepdims=True)
    lse = jnp.log(jnp.sum(jnp.exp(z), axis=-1, keepdims=True))
    nll = -jnp.sum(onehot_ref[...] * (z - lse), axis=-1, keepdims=True)   # (B, 1)
    loss_ref[...] = jnp.mean(nll, axis=0, keepdims=True)                  # (1, 1)


def cross_entropy(logits, labels):
    """Mean cross-entropy over the batch (matches nn.CrossEntropyLoss default)."""
    B, C = logits.shape
    onehot = jax.nn.one_hot(labels.reshape(-1), C, dtype=jnp.float32)
    loss = pl.pallas_call(
        _ce_kernel,
        out_shape=jax.ShapeDtypeStruct((1, 1), jnp.float32),
        grid=(1,),
        in_specs=[
            pl.BlockSpec((B, C), lambda i: (0, 0)),
            pl.BlockSpec((B, C), lambda i: (0, 0)),
        ],
        out_specs=pl.BlockSpec((1, 1), lambda i: (0, 0)),
        compiler_params=pltpu.CompilerParams(vmem_limit_bytes=_VMEM_LIMIT),
    )(logits.astype(jnp.float32), onehot)
    return loss[0, 0]


# --------------------------- parameter creation ----------------------------

def init_params(key, cfg, num_labels_dict):
    """Deterministic synthetic BERT + classifier-head weights (no checkpoint load)."""
    H, I = cfg["hidden"], cfg["intermediate"]
    hd = H // cfg["heads"]
    q_scale = 1.0 / math.sqrt(hd)

    def w_init(k, shape, std=0.02):
        # matmul weights stored in bf16 for the MXU / HBM-bandwidth savings.
        return (std * jax.random.normal(k, shape)).astype(jnp.bfloat16)

    def emb_init(k, shape, std=0.02):
        return (std * jax.random.normal(k, shape)).astype(jnp.float32)

    n_keys = 4 + 4 * cfg["layers"] + len(num_labels_dict)
    keys = iter(jax.random.split(key, n_keys))
    p = {}
    p["word_emb"] = emb_init(next(keys), (cfg["vocab"], H))
    p["pos_emb"] = emb_init(next(keys), (cfg["max_pos"], H))
    p["type_emb"] = emb_init(next(keys), (cfg["type_vocab"], H))
    p["emb_ln_g"] = jnp.ones((H,), jnp.float32)
    p["emb_ln_b"] = jnp.zeros((H,), jnp.float32)

    # Fold the 1/sqrt(head_dim) attention scale into the Q projection (first H
    # columns of the fused QKV weight/bias), so the attention kernel never
    # multiplies the (S, hd) Q block at runtime.
    col_scale = jnp.concatenate([jnp.full((H,), q_scale, jnp.float32),
                                 jnp.ones((2 * H,), jnp.float32)])

    layers = []
    for _ in range(cfg["layers"]):
        w_qkv_f32 = 0.02 * jax.random.normal(next(keys), (H, 3 * H))
        layers.append(dict(
            w_qkv=(w_qkv_f32 * col_scale).astype(jnp.bfloat16),
            b_qkv=jnp.zeros((3 * H,), jnp.float32) * col_scale,
            wo=w_init(next(keys), (H, H)), bo=jnp.zeros((H,), jnp.float32),
            ln1_g=jnp.ones((H,), jnp.float32), ln1_b=jnp.zeros((H,), jnp.float32),
            w1=w_init(next(keys), (H, I)), b1=jnp.zeros((I,), jnp.float32),
            w2=w_init(next(keys), (I, H)), b2=jnp.zeros((H,), jnp.float32),
            ln2_g=jnp.ones((H,), jnp.float32), ln2_b=jnp.zeros((H,), jnp.float32),
        ))
    p["layers"] = layers

    p["pool_w"] = w_init(next(keys), (H, H))
    p["pool_b"] = jnp.zeros((H,), jnp.float32)

    p["cls"] = {
        task: (w_init(next(keys), (H, n)), jnp.zeros((n,), jnp.float32))
        for task, n in num_labels_dict.items()
    }
    return p


# ------------------------------ forward pass -------------------------------

def bert_multitask_forward(params, cfg, input_ids, attention_mask, token_type_ids,
                           task=None, labels=None):
    B, S = input_ids.shape
    H = cfg["hidden"]
    nH = cfg["heads"]

    # --- embeddings (gathers are glue; LN is a tiled kernel) ---
    emb = (jnp.take(params["word_emb"], input_ids, axis=0)
           + params["pos_emb"][None, :S, :]
           + jnp.take(params["type_emb"], token_type_ids, axis=0)).astype(jnp.float32)
    x = layernorm(emb.reshape(B * S, H), params["emb_ln_g"], params["emb_ln_b"])  # bf16

    # --- additive attention mask (broadcast over heads inside the kernel) ---
    mask_add = ((1.0 - attention_mask.astype(jnp.float32)) * -1e9).reshape(B, 1, S)

    # --- transformer encoder layers ---
    for l in params["layers"]:
        qkv = linear(x, l["w_qkv"], l["b_qkv"])                    # (B*S, 3H) bf16, fused Q|K|V
        # (B*S, 3H) -> (B, S, 3H) is a contiguous metadata-only reshape; the
        # attention kernel slices heads out of the fused slab inside VMEM.
        ctx = multihead_attention(qkv.reshape(B, S, 3 * H), mask_add, num_heads=nH)
        ctx = ctx.reshape(B * S, H)                                # metadata-only reshape
        # attention output projection fused with residual add + LayerNorm
        x = linear_residual_layernorm(ctx, l["wo"], l["bo"], x, l["ln1_g"], l["ln1_b"])
        ffn = linear(x, l["w1"], l["b1"], act="gelu")
        # FFN down-projection fused with residual add + LayerNorm
        x = linear_residual_layernorm(ffn, l["w2"], l["b2"], x, l["ln2_g"], l["ln2_b"])

    # --- BERT pooler: tanh(W * h[CLS] + b) ---
    pooled = linear(x.reshape(B, S, H)[:, 0, :], params["pool_w"], params["pool_b"],
                    act="tanh")
    # nn.Dropout(0.1) is identity at inference time.

    result = {}
    if task:
        w, b = params["cls"][task]
        logits = linear(pooled, w, b, out_dtype=jnp.float32)
        result["logits"] = logits
        if labels is not None:
            result["loss"] = cross_entropy(logits, labels)
        return result

    # multi-task path: run all classifier heads as one fused matmul, slice logits.
    names = list(params["cls"].keys())
    w_cat = jnp.concatenate([params["cls"][n][0] for n in names], axis=1)
    b_cat = jnp.concatenate([params["cls"][n][1] for n in names], axis=0)
    all_logits = linear(pooled, w_cat, b_cat, out_dtype=jnp.float32)
    off = 0
    for n in names:
        nl = params["cls"][n][0].shape[1]
        result[n] = {"logits": all_logits[:, off:off + nl]}
        off += nl
    if labels is not None:
        for n in names:
            if n in labels:
                result[n]["loss"] = cross_entropy(result[n]["logits"], labels[n])
    return result


# ----------------------------------- main -----------------------------------

if __name__ == "__main__":
    cfg = dict(vocab=100, hidden=32, layers=2, heads=4, intermediate=64,
               max_pos=16, type_vocab=2)
    num_labels_dict = {"sentiment": 3, "topic": 4}

    key = jax.random.PRNGKey(0)
    pkey, ikey, lkey = jax.random.split(key, 3)
    params = init_params(pkey, cfg, num_labels_dict)

    B, S = 2, 8
    input_ids = jax.random.randint(ikey, (B, S), 0, cfg["vocab"], dtype=jnp.int32)
    attention_mask = jnp.array([[1, 1, 1, 1, 1, 1, 1, 1],
                                [1, 1, 1, 1, 1, 1, 0, 0]], dtype=jnp.int32)
    token_type_ids = jnp.zeros((B, S), dtype=jnp.int32)

    # Multi-task forward: logits for every classifier head.
    out_all = bert_multitask_forward(params, cfg, input_ids, attention_mask,
                                     token_type_ids)
    jax.block_until_ready(out_all)

    # Single-task forward with labels: logits + cross-entropy loss.
    labels = jax.random.randint(lkey, (B,), 0, num_labels_dict["sentiment"],
                                dtype=jnp.int32)
    out_single = bert_multitask_forward(params, cfg, input_ids, attention_mask,
                                        token_type_ids, task="sentiment",
                                        labels=labels)
    jax.block_until_ready(out_single)

    assert set(out_all.keys()) == set(num_labels_dict.keys())
    assert out_all["sentiment"]["logits"].shape == (B, 3)
    assert out_all["topic"]["logits"].shape == (B, 4)
    assert out_single["logits"].shape == (B, 3)
    assert out_single["loss"].shape == ()
    assert bool(jnp.isfinite(out_single["loss"]))

    print("KERNEL_OK")
</pallas_src>

<mosaic_0001>
module attributes {stable_mosaic.version = 11 : i64} {
  func.func @_ln_kernel(%arg0: i32, %arg1: memref<16x32xf32, #tpu.memory_space<vmem>>, %arg2: memref<1x32xf32, #tpu.memory_space<vmem>>, %arg3: memref<1x32xf32, #tpu.memory_space<vmem>>, %arg4: memref<16x32xbf16, #tpu.memory_space<vmem>>) attributes {dimension_semantics = [#tpu.dimension_semantics<parallel>], iteration_bounds = array<i64: 1>, scalar_prefetch = 0 : i64, scratch_operands = 0 : i64, tpu.core_type = #tpu.core_type<tc>, window_params = [{transform_indices = @transform_0, window_bounds = array<i64: 16, 32>}, {pipeline_mode = #tpu.pipeline_mode<synchronous>, transform_indices = @transform_1, window_bounds = array<i64: 1, 32>}, {pipeline_mode = #tpu.pipeline_mode<synchronous>, transform_indices = @transform_2, window_bounds = array<i64: 1, 32>}, {transform_indices = @transform_3, window_bounds = array<i64: 16, 32>}]} {
    %c0 = arith.constant 0 : index
    %c0_0 = arith.constant 0 : index
    %0 = vector.load %arg1[%c0, %c0_0] : memref<16x32xf32, #tpu.memory_space<vmem>>, vector<16x32xf32>
    %cst = arith.constant dense<0.000000e+00> : vector<16xf32>
    %1 = vector.multi_reduction <add>, %0, %cst [1] : vector<16x32xf32> to vector<16xf32>
    %2 = vector.shape_cast %1 : vector<16xf32> to vector<16x1xf32>
    %cst_1 = arith.constant 3.200000e+01 : f32
    %3 = vector.broadcast %cst_1 : f32 to vector<16x1xf32>
    %4 = arith.divf %2, %3 : vector<16x1xf32>
    %5 = vector.broadcast %4 : vector<16x1xf32> to vector<16x32xf32>
    %6 = arith.subf %0, %5 : vector<16x32xf32>
    %7 = arith.mulf %6, %6 : vector<16x32xf32>
    %cst_2 = arith.constant dense<0.000000e+00> : vector<16xf32>
    %8 = vector.multi_reduction <add>, %7, %cst_2 [1] : vector<16x32xf32> to vector<16xf32>
    %9 = vector.shape_cast %8 : vector<16xf32> to vector<16x1xf32>
    %cst_3 = arith.constant 3.200000e+01 : f32
    %10 = vector.broadcast %cst_3 : f32 to vector<16x1xf32>
    %11 = arith.divf %9, %10 : vector<16x1xf32>
    %12 = vector.broadcast %4 : vector<16x1xf32> to vector<16x32xf32>
    %13 = arith.subf %0, %12 : vector<16x32xf32>
    %cst_4 = arith.constant 9.99999996E-13 : f32
    %14 = vector.broadcast %cst_4 : f32 to vector<16x1xf32>
    %15 = arith.addf %11, %14 : vector<16x1xf32>
    %16 = math.rsqrt %15 : vector<16x1xf32>
    %17 = vector.broadcast %16 : vector<16x1xf32> to vector<16x32xf32>
    %18 = arith.mulf %13, %17 : vector<16x32xf32>
    %c0_5 = arith.constant 0 : index
    %c0_6 = arith.constant 0 : index
    %19 = vector.load %arg2[%c0_5, %c0_6] : memref<1x32xf32, #tpu.memory_space<vmem>>, vector<1x32xf32>
    %20 = vector.broadcast %19 : vector<1x32xf32> to vector<16x32xf32>
    %21 = arith.mulf %18, %20 : vector<16x32xf32>
    %c0_7 = arith.constant 0 : index
    %c0_8 = arith.constant 0 : index
    %22 = vector.load %arg3[%c0_7, %c0_8] : memref<1x32xf32, #tpu.memory_space<vmem>>, vector<1x32xf32>
    %23 = vector.broadcast %22 : vector<1x32xf32> to vector<16x32xf32>
    %24 = arith.addf %21, %23 : vector<16x32xf32>
    %25 = arith.truncf %24 : vector<16x32xf32> to vector<16x32xbf16>
    %c0_9 = arith.constant 0 : index
    %c0_10 = arith.constant 0 : index
    %26 = vector.load %arg4[%c0_9, %c0_10] : memref<16x32xbf16, #tpu.memory_space<vmem>>, vector<16x32xbf16>
    tpu.vector_store %arg4[%c0_9, %c0_10], %25 {strides = array<i32>} : memref<16x32xbf16, #tpu.memory_space<vmem>>, vector<16x32xbf16>,
    return
  }
  func.func @transform_0(%arg0: i32) -> (i32, i32) {
    %c0_i32 = arith.constant 0 : i32
    %c0_i32_0 = arith.constant 0 : i32
    return %arg0, %c0_i32 : i32, i32
  }
  func.func @transform_1(%arg0: i32) -> (i32, i32) {
    %c0_i32 = arith.constant 0 : i32
    %c0_i32_0 = arith.constant 0 : i32
    %c0_i32_1 = arith.constant 0 : i32
    return %c0_i32, %c0_i32_0 : i32, i32
  }
  func.func @transform_2(%arg0: i32) -> (i32, i32) {
    %c0_i32 = arith.constant 0 : i32
    %c0_i32_0 = arith.constant 0 : i32
    %c0_i32_1 = arith.constant 0 : i32
    return %c0_i32, %c0_i32_0 : i32, i32
  }
  func.func @transform_3(%arg0: i32) -> (i32, i32) {
    %c0_i32 = arith.constant 0 : i32
    %c0_i32_0 = arith.constant 0 : i32
    return %arg0, %c0_i32 : i32, i32
  }
}

</mosaic_0001>

<llo_original>
// kernel: tpu_custom_call.1
$region0: #{tpu_custom_call.1}
  #allocation0 [shape = 'u32[]', space=smem, size = 0x4, offset = 0x4, fixed_abs, tag = 'smem constant byte address 0x4 - core index']
  #allocation1 [shape = 'u32[144,128]{1,0:T(1,128)}', space=vmem, size = 0x12000, scoped, tag = 'internal scratch']
  %s0 = inlined_call_operand.hbm [shape: f32[16,32], index: 0, kind: input, shape index: {}]
  %s1 = inlined_call_operand.vmem [shape: f32[1,32], index: 1, kind: input, shape index: {}]
  %s2 = inlined_call_operand.vmem [shape: f32[1,32], index: 2, kind: input, shape index: {}]
  %s3 = inlined_call_operand.hbm [shape: bf16[16,32], index: 3, kind: output, shape index: {}]
  %s4 = sld [smem:[#allocation0]]
  $region26: #{tpu_custom_call.1} parent=0
    _
  %s6 = ssub.s32 1, %s4
  %s7 = scalar_select 0, %s6, %s4
  $region1: #{tpu_custom_call.1} parent=0
    #allocation2 [shape = 'u8[8192]{0}', space=vmem, size = 0x2000, scoped, tag = 'input window, operand 0, single buffered']
    #allocation3 [shape = 's32[1]{0}', space=sflag, size = 0x4, scoped, tag = 'scoped memory for tpu_custom_call.1']
    #allocation4 [shape = 's32[1]{0}', space=sflag, size = 0x4, scoped, tag = 'scoped memory for tpu_custom_call.1']
    #allocation5 [shape = 'u8[4096]{0}', space=vmem, size = 0x1000, scoped, tag = 'output window, operand 0, single buffered']
    %8 = vsyncpa [#allocation3], 0
    %9 = vsyncpa [#allocation4], 0
    // Predicated region
    $region2: #{tpu_custom_call.1} parent=1 // pred_check
      _
    $region3: #{tpu_custom_call.1} parent=1 // pred_check_branch
      %11 = sbr.rel (0) target = $region5
    $region4: #{tpu_custom_call.1} parent=1 // pred_region
      %s13 = ssub.s32 256, 256
      %14 = vsyncadd [#allocation3], %s13
      %s15 = sshll.u32 [#allocation2], 4
      %s16 = int_to_ptr.vmem [resolvable:$true] %s15
      %21 = dma.hbm_to_vmem [thread:$0]  %s0, 256, %s16, [#allocation3], 128, 128, 8
    $region5: #{tpu_custom_call.1} parent=1 // pred_fallthru
      _
    // Predicated region
    $region6: #{tpu_custom_call.1} parent=1 // pred_check
      _
    $region7: #{tpu_custom_call.1} parent=1 // pred_check_branch
      %23 = sbr.rel (0) target = $region9
    $region8: #{tpu_custom_call.1} parent=1 // pred_region
      _
    $region9: #{tpu_custom_call.1} parent=1 // pred_fallthru
      _
    // Predicated region
    $region10: #{tpu_custom_call.1} parent=1 // pred_check
      _
    $region11: #{tpu_custom_call.1} parent=1 // pred_check_branch
      %25 = sbr.rel (0) target = $region13
    $region12: #{tpu_custom_call.1} parent=1 // pred_region
      _
    $region13: #{tpu_custom_call.1} parent=1 // pred_fallthru
      _
    // Predicated region
    $region14: #{tpu_custom_call.1} parent=1 // pred_check
      _
    $region15: #{tpu_custom_call.1} parent=1 // pred_check_branch
      %27 = sbr.rel (0) target = $region17
    $region16: #{tpu_custom_call.1} parent=1 // pred_region
      %28 = dma.done [#allocation3], 256
    $region17: #{tpu_custom_call.1} parent=1 // pred_fallthru
      _
    %v29 = vld [vmem:[#allocation2] sm:$0xff]
    %v30 = vld [vmem:[#allocation2 + $0x8] sm:$0xff]
    %vm31 = vcmask 261120
    %v32 = vsel %vm31, %v29, 0.0
    %33 = vadd.xlane.f32.xlu0 %v32
    %v34 = vpop.xlane.xlu0 %33
    %v35 = vsel %vm31, %v30, 0.0
    %36 = vadd.xlane.f32.xlu0 %v35
    %v37 = vpop.xlane.xlu0 %36
    %v38 = vrcp.pop 32.0
    %v39 = vmul.f32 %v34, %v38
    %v40 = vmul.f32 %v37, %v38
    %v41 = vsub.f32 %v29, %v39
    %v42 = vsub.f32 %v30, %v40
    %v43 = vmul.f32 %v41, %v41
    %v44 = vmul.f32 %v42, %v42
    %v45 = vsel %vm31, %v43, 0.0
    %46 = vadd.xlane.f32.xlu0 %v45
    %v47 = vpop.xlane.xlu0 %46
    %v48 = vsel %vm31, %v44, 0.0
    %49 = vadd.xlane.f32.xlu0 %v48
    %v50 = vpop.xlane.xlu0 %49
    %v51 = vmul.f32 %v47, %v38
    %v52 = vmul.f32 %v50, %v38
    %v53 = vadd.f32 %v51, 1e-12
    %v54 = vadd.f32 %v52, 1e-12
    %v55 = vrsqrt.pop %v53
    %v56 = vrsqrt.pop %v54
    %v57 = vmul.f32 %v41, %v55
    %v58 = vmul.f32 %v42, %v56
    %v59 = vld [vmem:[%s1] sm:$0x1]
    %v61 = vlaneseq
    %v62 = vshrl.u32 %v61, 7
    %v63 = vsub.s32 0, %v62
    %v64 = vrot.slane %v59, %v63
    %v66 = vmul.f32 %v57, %v64
    %v67 = vmul.f32 %v58, %v64
    %v68 = vld [vmem:[%s2] sm:$0x1]
    %v70 = vlaneseq
    %v71 = vshrl.u32 %v70, 7
    %v72 = vsub.s32 0, %v71
    %v73 = vrot.slane %v68, %v72
    %v75 = vadd.f32 %v66, %v73
    %v76 = vadd.f32 %v67, %v73
    %v77 = vpack.c.bf16 %v76, %v75
    %v79 = vunpack.c.l.b16 %v77
    %v80 = vunpack.c.h.b16 %v77
    %v81 = vpack.c.b16 %v79, %v79
    %v82 = vpack.c.b16 %v80, %v80
    %vm85 = vcmask 257024
    %86 = vst.msk [vmem:[#allocation5] sm:$0xf] %vm85, %v81
    %87 = vst.msk [vmem:[#allocation5 + $0x4] sm:$0xf] %vm85, %v82
    // Predicated region
    $region18: #{tpu_custom_call.1} parent=1 // pred_check
      _
    $region19: #{tpu_custom_call.1} parent=1 // pred_check_branch
      %89 = sbr.rel (0) target = $region21
    $region20: #{tpu_custom_call.1} parent=1 // pred_region
      %s91 = ssub.s32 128, 128
      %92 = vsyncadd [#allocation4], %s91
      %s93 = sshll.u32 [#allocation5], 4
      %s94 = int_to_ptr.vmem [resolvable:$true] %s93
      %99 = dma.vmem_to_hbm [thread:$0]  %s94, 128, %s3, [#allocation4], 64, 64, 4
    $region21: #{tpu_custom_call.1} parent=1 // pred_fallthru
      _
    // Predicated region
    $region22: #{tpu_custom_call.1} parent=1 // pred_check
      _
    $region23: #{tpu_custom_call.1} parent=1 // pred_check_branch
      %101 = sbr.rel (0) target = $region25
    $region24: #{tpu_custom_call.1} parent=1 // pred_region
      %102 = dma.done [#allocation4], 128
    $region25: #{tpu_custom_call.1} parent=1 // pred_fallthru
      _
    %103 = vsyncpa [#allocation3], 1
    %104 = vsyncpa [#allocation4], 1

</llo_original>
